<compile_context>
chip_gen: v7x
topology: tpu7x:2x2x1
jax: 0.10.0
libtpu: 0.0.40
codegen_flags: <defaults>
</compile_context>

<pallas_src>
import jax
import jax.numpy as jnp
from jax.experimental import pallas as pl
from jax.experimental.pallas import tpu as pltpu


def coord_attention_kernel(x_ref, w1_ref, shift_ref, wh_ref, ww_ref,
                           phw_ref, eh_ref, ew_ref, o_ref):
    H = eh_ref.shape[0]

    x = x_ref[...]                                    # (bb*C, H*W), input dtype

    # (1) W-mean and H-mean pooling fused into one MXU matmul against a
    #     constant (HW, H+W) pooling matrix; the 256-wide lane axis stays dense.
    x_hw = jnp.dot(x, phw_ref[...],
                   preferred_element_type=jnp.float32)          # (bb*C, H+W)

    # (2) 1x1 conv C -> Cm (block-diagonal over the bb batch block, BN scale
    #     folded into the weight), + BN shift, + ReLU -- one matmul covers both
    #     the H and W halves.
    y = jnp.maximum(
        jnp.dot(w1_ref[...], x_hw, preferred_element_type=jnp.float32)
        + shift_ref[...], 0.0)                                  # (bb*Cm, H+W)

    # (3) 1x1 convs Cm -> C on the H half / W half, then sigmoid.
    s_h = jax.nn.sigmoid(
        jnp.dot(wh_ref[...], y[:, :H],
                preferred_element_type=jnp.float32))            # (bb*C, H)
    s_w = jax.nn.sigmoid(
        jnp.dot(ww_ref[...], y[:, H:],
                preferred_element_type=jnp.float32))            # (bb*C, W)

    # (4) Expand s_h / s_w back onto the flattened spatial axis with constant
    #     0/1 selection matrices (exact), gate in the input dtype, store
    #     lane-dense.
    gate = (jnp.dot(s_h.astype(eh_ref.dtype), eh_ref[...],
                    preferred_element_type=jnp.float32) *
            jnp.dot(s_w.astype(ew_ref.dtype), ew_ref[...],
                    preferred_element_type=jnp.float32))        # (bb*C, H*W)
    o_ref[...] = (x * gate.astype(x.dtype)).astype(o_ref.dtype)


def _pick_batch_block(B, per_batch_bytes, target_bytes=8 << 20, max_bb=32):
    """Choose the batch-block size bb (divides B) such that:
      (a) the grid has >= min(4, B) steps -> DMA/compute pipelining and both
          v7x TensorCores get work (never collapses to a single grid step),
      (b) bb <= max_bb so the block-diagonal conv weights stay in the KB range
          and the block-diagonal dense-zero MXU work stays a small fraction,
      (c) each x block is <= target_bytes (amortizes per-step overhead while
          staying well inside scoped VMEM on every TPU generation)."""
    min_steps = min(4, max(B, 1))
    bb = max(1, min(B // min_steps, max_bb,
                    target_bytes // max(per_batch_bytes, 1)))
    while B % bb:
        bb -= 1
    return bb


def coord_attention(x, w1, gamma, beta, running_mean, running_var, wh, ww,
                    eps=1e-5, block_batch=None):
    B, C, H, W = x.shape
    Cm = w1.shape[0]
    HW = H * W
    in_dt = x.dtype
    itemsize = jnp.dtype(in_dt).itemsize

    # Fold BN running stats + affine into scale/shift; fold scale into w1.
    inv_std = 1.0 / jnp.sqrt(running_var.astype(jnp.float32) + eps)
    scale = gamma.astype(jnp.float32) * inv_std                       # (Cm,)
    shift = beta.astype(jnp.float32) - running_mean.astype(jnp.float32) * scale
    w1s = w1.astype(jnp.float32) * scale[:, None]                     # (Cm, C)

    # Batch-block size (capped, guarantees multiple grid steps).
    if block_batch is None:
        bb = _pick_batch_block(B, C * HW * itemsize)
    else:
        assert B % block_batch == 0
        bb = block_batch
    grid = (B // bb,)
    # (8, 128) BlockSpec rule: the sublane block dim must be a multiple of 8
    # unless the block spans the whole array.
    assert (bb * C) % 8 == 0 or bb == B, (
        f"bb*C={bb * C} must be a multiple of 8 (or bb == B)")

    # Small block-diagonal weights (bb capped, so these stay tiny) make the
    # whole bb-batch block one chain of plain 2-D MXU matmuls.
    eye = jnp.eye(bb, dtype=jnp.float32)
    w1_bd = jnp.kron(eye, w1s)                                        # (bb*Cm, bb*C)
    wh_bd = jnp.kron(eye, wh.astype(jnp.float32))                     # (bb*C, bb*Cm)
    ww_bd = jnp.kron(eye, ww.astype(jnp.float32))                     # (bb*C, bb*Cm)
    shift_bd = jnp.tile(shift, bb).reshape(bb * Cm, 1)                # (bb*Cm, 1)

    # Constant pooling / expansion matrices on the flattened spatial axis,
    # built in the activation dtype (0/1 and 1/W entries).
    row = jnp.arange(HW) // W                                         # h index per lane
    col = jnp.arange(HW) % W                                          # w index per lane
    p_h = (row[:, None] == jnp.arange(H)[None, :]).astype(jnp.float32) / W  # (HW, H)
    p_w = (col[:, None] == jnp.arange(W)[None, :]).astype(jnp.float32) / H  # (HW, W)
    p_hw = jnp.concatenate([p_h, p_w], axis=1).astype(in_dt)          # (HW, H+W)
    e_h = (jnp.arange(H)[:, None] == row[None, :]).astype(in_dt)      # (H, HW)
    e_w = (jnp.arange(W)[:, None] == col[None, :]).astype(in_dt)      # (W, HW)

    # Lane-dense view of x (free reshape: contiguous NCHW -> (B*C, H*W)).
    x2 = x.reshape(B * C, HW)

    # Advisory cost estimate for XLA scheduling.
    steps = B // bb
    weight_bytes = int(
        4 * (w1_bd.size + wh_bd.size + ww_bd.size + shift_bd.size)
        + itemsize * (p_hw.size + e_h.size + e_w.size))
    bytes_accessed = int(2 * B * C * HW * itemsize + weight_bytes)
    flops = int(
        2 * B * C * HW * (H + W)                          # fused pooling matmul
        + 2 * steps * (bb * Cm) * (bb * C) * (H + W)      # block-diag C -> Cm
        + 2 * steps * (bb * C) * (bb * Cm) * (H + W)      # block-diag Cm -> C
        + 2 * B * C * (H + W) * HW                        # gate expansion
        + 2 * B * C * HW)                                 # final gating multiplies
    cost = pl.CostEstimate(flops=flops,
                           transcendentals=int(B * C * (H + W)),
                           bytes_accessed=bytes_accessed)

    out2 = pl.pallas_call(
        coord_attention_kernel,
        out_shape=jax.ShapeDtypeStruct((B * C, HW), in_dt),
        grid_spec=pltpu.PrefetchScalarGridSpec(
            num_scalar_prefetch=0,
            grid=grid,
            in_specs=[
                pl.BlockSpec((bb * C, HW), lambda i: (i, 0)),   # x block
                pl.BlockSpec(w1_bd.shape, lambda i: (0, 0)),    # C->Cm (BN folded)
                pl.BlockSpec(shift_bd.shape, lambda i: (0, 0)), # BN shift
                pl.BlockSpec(wh_bd.shape, lambda i: (0, 0)),    # F_h
                pl.BlockSpec(ww_bd.shape, lambda i: (0, 0)),    # F_w
                pl.BlockSpec(p_hw.shape, lambda i: (0, 0)),     # fused pooling
                pl.BlockSpec(e_h.shape, lambda i: (0, 0)),      # H expansion
                pl.BlockSpec(e_w.shape, lambda i: (0, 0)),      # W expansion
            ],
            out_specs=pl.BlockSpec((bb * C, HW), lambda i: (i, 0)),
        ),
        compiler_params=pltpu.CompilerParams(
            dimension_semantics=("parallel",),
            # Small tiles + small constants: 32 MiB scoped VMEM is plenty and
            # leaves ample headroom on v7x (64 MiB/TC) as well as v5e/v6e.
            vmem_limit_bytes=32 * 1024 * 1024,
        ),
        cost_estimate=cost,
    )(x2, w1_bd, shift_bd, wh_bd, ww_bd, p_hw, e_h, e_w)

    return out2.reshape(B, C, H, W)


def coord_attention_ref(x, w1, gamma, beta, rm, rv, wh, ww, eps=1e-5):
    """Pure-JAX reference matching the PyTorch forward (eval-mode BN)."""
    B, C, H, W = x.shape
    x_h = jnp.mean(x, axis=3)                       # (B, C, H)
    x_w = jnp.mean(x, axis=2)                       # (B, C, W)
    u = jnp.concatenate([x_h, x_w], axis=2)         # (B, C, H+W)
    y = jnp.einsum('mc,bcl->bml', w1, u)
    y = (y - rm[None, :, None]) / jnp.sqrt(rv[None, :, None] + eps)
    y = y * gamma[None, :, None] + beta[None, :, None]
    y = jnp.maximum(y, 0.0)
    y_h, y_w = y[:, :, :H], y[:, :, H:]
    s_h = jax.nn.sigmoid(jnp.einsum('cm,bml->bcl', wh, y_h))  # (B, C, H)
    s_w = jax.nn.sigmoid(jnp.einsum('cm,bml->bcl', ww, y_w))  # (B, C, W)
    return x * s_h[:, :, :, None] * s_w[:, :, None, :]


if __name__ == "__main__":
    B, C, H, W = 2, 32, 16, 16          # channel must be >= 16 (channel // 16 > 0)
    Cm = C // 16

    key = jax.random.PRNGKey(0)
    kx, k1, k2, k3, kg, kb, km, kv = jax.random.split(key, 8)

    x = jax.random.normal(kx, (B, C, H, W), dtype=jnp.float32)

    # 1x1 conv weights are (out, in, 1, 1) in PyTorch -> stored as 2-D matrices.
    w1 = jax.random.normal(k1, (Cm, C), dtype=jnp.float32) * 0.2   # _1x1conv
    wh = jax.random.normal(k2, (C, Cm), dtype=jnp.float32) * 0.2   # F_h
    ww = jax.random.normal(k3, (C, Cm), dtype=jnp.float32) * 0.2   # F_w
    gamma = 1.0 + 0.1 * jax.random.normal(kg, (Cm,), dtype=jnp.float32)  # bn.weight
    beta = 0.1 * jax.random.normal(kb, (Cm,), dtype=jnp.float32)         # bn.bias
    running_mean = 0.1 * jax.random.normal(km, (Cm,), dtype=jnp.float32)
    running_var = 0.5 + jnp.abs(jax.random.normal(kv, (Cm,), dtype=jnp.float32))

    out = coord_attention(x, w1, gamma, beta, running_mean, running_var, wh, ww)
    out = jax.block_until_ready(out)

    ref = coord_attention_ref(x, w1, gamma, beta, running_mean, running_var, wh, ww)
    assert out.shape == (B, C, H, W)
    assert jnp.allclose(out, ref, atol=2e-5, rtol=2e-5), "mismatch vs reference"

    print("KERNEL_OK")
</pallas_src>

<mosaic_0001>
module attributes {stable_mosaic.version = 11 : i64} {
  func.func @coord_attention_kernel(%arg0: i32, %arg1: memref<32x256xf32, #tpu.memory_space<vmem>>, %arg2: memref<2x32xf32, #tpu.memory_space<vmem>>, %arg3: memref<2x1xf32, #tpu.memory_space<vmem>>, %arg4: memref<32x2xf32, #tpu.memory_space<vmem>>, %arg5: memref<32x2xf32, #tpu.memory_space<vmem>>, %arg6: memref<256x32xf32, #tpu.memory_space<vmem>>, %arg7: memref<16x256xf32, #tpu.memory_space<vmem>>, %arg8: memref<16x256xf32, #tpu.memory_space<vmem>>, %arg9: memref<32x256xf32, #tpu.memory_space<vmem>>) attributes {dimension_semantics = [#tpu.dimension_semantics<parallel>], iteration_bounds = array<i64: 2>, scalar_prefetch = 0 : i64, scratch_operands = 0 : i64, tpu.core_type = #tpu.core_type<tc>, window_params = [{transform_indices = @transform_0, window_bounds = array<i64: 32, 256>}, {pipeline_mode = #tpu.pipeline_mode<synchronous>, transform_indices = @transform_1, window_bounds = array<i64: 2, 32>}, {pipeline_mode = #tpu.pipeline_mode<synchronous>, transform_indices = @transform_2, window_bounds = array<i64: 2, 1>}, {pipeline_mode = #tpu.pipeline_mode<synchronous>, transform_indices = @transform_3, window_bounds = array<i64: 32, 2>}, {pipeline_mode = #tpu.pipeline_mode<synchronous>, transform_indices = @transform_4, window_bounds = array<i64: 32, 2>}, {pipeline_mode = #tpu.pipeline_mode<synchronous>, transform_indices = @transform_5, window_bounds = array<i64: 256, 32>}, {pipeline_mode = #tpu.pipeline_mode<synchronous>, transform_indices = @transform_6, window_bounds = array<i64: 16, 256>}, {pipeline_mode = #tpu.pipeline_mode<synchronous>, transform_indices = @transform_7, window_bounds = array<i64: 16, 256>}, {transform_indices = @transform_8, window_bounds = array<i64: 32, 256>}]} {
    %c0 = arith.constant 0 : index
    %c0_0 = arith.constant 0 : index
    %0 = vector.load %arg1[%c0, %c0_0] : memref<32x256xf32, #tpu.memory_space<vmem>>, vector<32x256xf32>
    %c0_1 = arith.constant 0 : index
    %c0_2 = arith.constant 0 : index
    %1 = vector.load %arg6[%c0_1, %c0_2] : memref<256x32xf32, #tpu.memory_space<vmem>>, vector<256x32xf32>
    %cst = arith.constant dense<0.000000e+00> : vector<32x32xf32>
    %2 = tpu.matmul %0, %1, %cst {dimension_numbers = #tpu.dot_dimension_numbers<[1], [0], [0], [1], [0, 0, 1, 1], [], []>} : vector<32x256xf32>, vector<256x32xf32>, vector<32x32xf32> -> vector<32x32xf32>
    %c0_3 = arith.constant 0 : index
    %c0_4 = arith.constant 0 : index
    %3 = vector.load %arg2[%c0_3, %c0_4] : memref<2x32xf32, #tpu.memory_space<vmem>>, vector<2x32xf32>
    %cst_5 = arith.constant dense<0.000000e+00> : vector<2x32xf32>
    %4 = tpu.matmul %3, %2, %cst_5 {dimension_numbers = #tpu.dot_dimension_numbers<[1], [0], [0], [1], [0, 0, 1, 1], [], []>} : vector<2x32xf32>, vector<32x32xf32>, vector<2x32xf32> -> vector<2x32xf32>
    %c0_6 = arith.constant 0 : index
    %c0_7 = arith.constant 0 : index
    %5 = vector.load %arg3[%c0_6, %c0_7] : memref<2x1xf32, #tpu.memory_space<vmem>>, vector<2x1xf32>
    %6 = vector.broadcast %5 : vector<2x1xf32> to vector<2x32xf32>
    %7 = arith.addf %4, %6 : vector<2x32xf32>
    %cst_8 = arith.constant 0.000000e+00 : f32
    %8 = vector.broadcast %cst_8 : f32 to vector<2x32xf32>
    %9 = arith.maximumf %7, %8 : vector<2x32xf32>
    %c0_9 = arith.constant 0 : index
    %c0_10 = arith.constant 0 : index
    %10 = vector.load %arg4[%c0_9, %c0_10] : memref<32x2xf32, #tpu.memory_space<vmem>>, vector<32x2xf32>
    %11 = vector.extract_strided_slice %9 {offsets = [0, 0], sizes = [2, 16], strides = [1, 1]} : vector<2x32xf32> to vector<2x16xf32>
    %cst_11 = arith.constant dense<0.000000e+00> : vector<32x16xf32>
    %12 = tpu.matmul %10, %11, %cst_11 {dimension_numbers = #tpu.dot_dimension_numbers<[1], [0], [0], [1], [0, 0, 1, 1], [], []>} : vector<32x2xf32>, vector<2x16xf32>, vector<32x16xf32> -> vector<32x16xf32>
    %13 = arith.negf %12 : vector<32x16xf32>
    %14 = math.exp %13 : vector<32x16xf32>
    %cst_12 = arith.constant 1.000000e+00 : f32
    %15 = vector.broadcast %cst_12 : f32 to vector<32x16xf32>
    %16 = arith.addf %15, %14 : vector<32x16xf32>
    %17 = arith.divf %15, %16 : vector<32x16xf32>
    %c0_13 = arith.constant 0 : index
    %c0_14 = arith.constant 0 : index
    %18 = vector.load %arg5[%c0_13, %c0_14] : memref<32x2xf32, #tpu.memory_space<vmem>>, vector<32x2xf32>
    %19 = vector.extract_strided_slice %9 {offsets = [0, 16], sizes = [2, 16], strides = [1, 1]} : vector<2x32xf32> to vector<2x16xf32>
    %cst_15 = arith.constant dense<0.000000e+00> : vector<32x16xf32>
    %20 = tpu.matmul %18, %19, %cst_15 {dimension_numbers = #tpu.dot_dimension_numbers<[1], [0], [0], [1], [0, 0, 1, 1], [], []>} : vector<32x2xf32>, vector<2x16xf32>, vector<32x16xf32> -> vector<32x16xf32>
    %21 = arith.negf %20 : vector<32x16xf32>
    %22 = math.exp %21 : vector<32x16xf32>
    %cst_16 = arith.constant 1.000000e+00 : f32
    %23 = vector.broadcast %cst_16 : f32 to vector<32x16xf32>
    %24 = arith.addf %23, %22 : vector<32x16xf32>
    %25 = arith.divf %23, %24 : vector<32x16xf32>
    %c0_17 = arith.constant 0 : index
    %c0_18 = arith.constant 0 : index
    %26 = vector.load %arg7[%c0_17, %c0_18] : memref<16x256xf32, #tpu.memory_space<vmem>>, vector<16x256xf32>
    %cst_19 = arith.constant dense<0.000000e+00> : vector<32x256xf32>
    %27 = tpu.matmul %17, %26, %cst_19 {dimension_numbers = #tpu.dot_dimension_numbers<[1], [0], [0], [1], [0, 0, 1, 1], [], []>} : vector<32x16xf32>, vector<16x256xf32>, vector<32x256xf32> -> vector<32x256xf32>
    %c0_20 = arith.constant 0 : index
    %c0_21 = arith.constant 0 : index
    %28 = vector.load %arg8[%c0_20, %c0_21] : memref<16x256xf32, #tpu.memory_space<vmem>>, vector<16x256xf32>
    %cst_22 = arith.constant dense<0.000000e+00> : vector<32x256xf32>
    %29 = tpu.matmul %25, %28, %cst_22 {dimension_numbers = #tpu.dot_dimension_numbers<[1], [0], [0], [1], [0, 0, 1, 1], [], []>} : vector<32x16xf32>, vector<16x256xf32>, vector<32x256xf32> -> vector<32x256xf32>
    %30 = arith.mulf %27, %29 : vector<32x256xf32>
    %31 = arith.mulf %0, %30 : vector<32x256xf32>
    %c0_23 = arith.constant 0 : index
    %c0_24 = arith.constant 0 : index
    %32 = vector.load %arg9[%c0_23, %c0_24] : memref<32x256xf32, #tpu.memory_space<vmem>>, vector<32x256xf32>
    tpu.vector_store %arg9[%c0_23, %c0_24], %31 {strides = array<i32>} : memref<32x256xf32, #tpu.memory_space<vmem>>, vector<32x256xf32>,
    return
  }
  func.func @transform_0(%arg0: i32) -> (i32, i32) {
    %c0_i32 = arith.constant 0 : i32
    %c0_i32_0 = arith.constant 0 : i32
    return %arg0, %c0_i32 : i32, i32
  }
  func.func @transform_1(%arg0: i32) -> (i32, i32) {
    %c0_i32 = arith.constant 0 : i32
    %c0_i32_0 = arith.constant 0 : i32
    %c0_i32_1 = arith.constant 0 : i32
    return %c0_i32, %c0_i32_0 : i32, i32
  }
  func.func @transform_2(%arg0: i32) -> (i32, i32) {
    %c0_i32 = arith.constant 0 : i32
    %c0_i32_0 = arith.constant 0 : i32
    %c0_i32_1 = arith.constant 0 : i32
    return %c0_i32, %c0_i32_0 : i32, i32
  }
  func.func @transform_3(%arg0: i32) -> (i32, i32) {
    %c0_i32 = arith.constant 0 : i32
    %c0_i32_0 = arith.constant 0 : i32
    %c0_i32_1 = arith.constant 0 : i32
    return %c0_i32, %c0_i32_0 : i32, i32
  }
  func.func @transform_4(%arg0: i32) -> (i32, i32) {
    %c0_i32 = arith.constant 0 : i32
    %c0_i32_0 = arith.constant 0 : i32
    %c0_i32_1 = arith.constant 0 : i32
    return %c0_i32, %c0_i32_0 : i32, i32
  }
  func.func @transform_5(%arg0: i32) -> (i32, i32) {
    %c0_i32 = arith.constant 0 : i32
    %c0_i32_0 = arith.constant 0 : i32
    %c0_i32_1 = arith.constant 0 : i32
    return %c0_i32, %c0_i32_0 : i32, i32
  }
  func.func @transform_6(%arg0: i32) -> (i32, i32) {
    %c0_i32 = arith.constant 0 : i32
    %c0_i32_0 = arith.constant 0 : i32
    %c0_i32_1 = arith.constant 0 : i32
    return %c0_i32, %c0_i32_0 : i32, i32
  }
  func.func @transform_7(%arg0: i32) -> (i32, i32) {
    %c0_i32 = arith.constant 0 : i32
    %c0_i32_0 = arith.constant 0 : i32
    %c0_i32_1 = arith.constant 0 : i32
    return %c0_i32, %c0_i32_0 : i32, i32
  }
  func.func @transform_8(%arg0: i32) -> (i32, i32) {
    %c0_i32 = arith.constant 0 : i32
    %c0_i32_0 = arith.constant 0 : i32
    return %arg0, %c0_i32 : i32, i32
  }
}

</mosaic_0001>

<llo_original>
// kernel: tpu_custom_call.1
$region0: #{tpu_custom_call.1}
  #allocation0 [shape = 'u32[]', space=smem, size = 0x4, offset = 0x4, fixed_abs, tag = 'smem constant byte address 0x4 - core index']
  #allocation1 [shape = 'u32[144,128]{1,0:T(1,128)}', space=vmem, size = 0x12000, scoped, tag = 'internal scratch']
  %s0 = inlined_call_operand.vmem [shape: f32[64,256], index: 0, kind: input, shape index: {}]
  %s1 = inlined_call_operand.vmem [shape: f32[2,32], index: 1, kind: input, shape index: {}]
  %s2 = inlined_call_operand.vmem [shape: f32[2,1], index: 2, kind: input, shape index: {}]
  %s3 = inlined_call_operand.vmem [shape: f32[32,2], index: 3, kind: input, shape index: {}]
  %s4 = inlined_call_operand.vmem [shape: f32[32,2], index: 4, kind: input, shape index: {}]
  %s5 = inlined_call_operand.vmem [shape: f32[256,32], index: 5, kind: input, shape index: {}]
  %s6 = inlined_call_operand.vmem [shape: f32[16,256], index: 6, kind: input, shape index: {}]
  %s7 = inlined_call_operand.vmem [shape: f32[16,256], index: 7, kind: input, shape index: {}]
  %s8 = inlined_call_operand.hbm [shape: f32[64,256], index: 8, kind: output, shape index: {}]
  %s9 = sld [smem:[#allocation0]]
  $region65: #{tpu_custom_call.1} parent=0
    _
  %s11 = ssub.s32 1, %s9
  %s12 = scalar_select 0, %s11, %s9
  $region1: #{tpu_custom_call.1} parent=0
    #allocation2 [shape = 'u8[65536]{0}', space=vmem, size = 0x10000, scoped, tag = 'output window, operand 0']
    #allocation3 [shape = 's32[2]{0}', space=sflag, size = 0x8, scoped, tag = 'scoped memory for tpu_custom_call.1']
    %13 = vsyncpa [#allocation3], 0
    %s14 = scalar_lea.sflag [#allocation3], 1
    %15 = vsyncpa %s14, 0
    loop: start=0, step=1, limit=4
    $region2: #{tpu_custom_call.1} parent=1 // loop_pre_header
      _
    $region3: #{tpu_custom_call.1} parent=1 // loop_header
      %s17 = sphi 0, %s21
      %p18 = scmp.ge.s32.totalorder %s17, 4
      %s27 = sphi 0, %s29
      %s30 = sphi 0, %s27
      %s31 = sphi 0, %s30
      %s47 = sphi 0, %s31
      %s51 = sphi 0, %s51
      %s53 = sphi 0, %s51
      %s54 = sphi 0, %s53
      %s68 = sphi 0, %s54
      %s72 = sphi 0, %s72
      %s74 = sphi 0, %s72
      %s75 = sphi 0, %s74
      %s89 = sphi 0, %s75
      %s93 = sphi 0, %s93
      %s95 = sphi 0, %s93
      %s96 = sphi 0, %s95
      %s110 = sphi 0, %s96
      %s114 = sphi 0, %s114
      %s116 = sphi 0, %s114
      %s117 = sphi 0, %s116
      %s131 = sphi 0, %s117
      %s135 = sphi 0, %s135
      %s137 = sphi 0, %s135
      %s138 = sphi 0, %s137
      %s152 = sphi 0, %s138
      %s156 = sphi 0, %s156
      %s158 = sphi 0, %s156
      %s159 = sphi 0, %s158
      %s173 = sphi 0, %s159
      %s177 = sphi 0, %s177
      %s179 = sphi 0, %s177
      %s180 = sphi 0, %s179
      %s194 = sphi 0, %s180
      %s200 = sphi 0, %s202
      %s203 = sphi 0, %s200
      %s204 = sphi 0, %s203
      %s220 = sphi 0, %s204
    $region4: #{tpu_custom_call.1} parent=1 // loop_header_branch
      %20 = sbr.rel (%p18) target = $region8
    $region5: #{tpu_custom_call.1} parent=1 // loop_body
      %s22 = ssub.s32 %s17, 1
      %s23 = ssub.s32 %s17, 2
      %s24 = sadd.s32 %s17, 1
      %s25 = ssub.s32 %s17, %s24
      %p26 = scmp.eq.s32.totalorder %s25, 0
      %s28 = sadd.s32 %s27, 1
      %s29 = scalar_select %p26, %s27, %s28
      %p32 = pneg %p26
      %p33 = scmp.eq.s32.totalorder %s17, 1
      %p34 = por %p32, %p33
      %p35 = scmp.ne.s32.totalorder %s27, %s30
      %p36 = scmp.eq.s32.totalorder %s17, 0
      %p37 = por %p35, %p36
      %p38 = scmp.ne.s32.totalorder %s27, %s30
      %p39 = scmp.eq.s32.totalorder %s22, 1
      %p40 = por %p38, %p39
      %p41 = scmp.ne.s32.totalorder %s30, %s31
      %p42 = scmp.eq.s32.totalorder %s22, 0
      %p43 = por %p41, %p42
      %p44 = scmp.ne.s32.totalorder %s30, %s31
      %p45 = scmp.eq.s32.totalorder %s23, 1
      %p46 = por %p44, %p45
      %p48 = scmp.ne.s32.totalorder %s31, %s47
      %p49 = scmp.eq.s32.totalorder %s23, 0
      %p50 = por %p48, %p49
      %s52 = sadd.s32 %s51, 1
      %p55 = scmp.eq.s32.totalorder %s17, 1
      %p56 = scmp.ne.s32.totalorder %s51, %s53
      %p57 = scmp.eq.s32.totalorder %s17, 0
      %p58 = por %p56, %p57
      %p59 = scmp.ne.s32.totalorder %s51, %s53
      %p60 = scmp.eq.s32.totalorder %s22, 1
      %p61 = por %p59, %p60
      %p62 = scmp.ne.s32.totalorder %s53, %s54
      %p63 = scmp.eq.s32.totalorder %s22, 0
      %p64 = por %p62, %p63
      %p65 = scmp.ne.s32.totalorder %s53, %s54
      %p66 = scmp.eq.s32.totalorder %s23, 1
      %p67 = por %p65, %p66
      %p69 = scmp.ne.s32.totalorder %s54, %s68
      %p70 = scmp.eq.s32.totalorder %s23, 0
      %p71 = por %p69, %p70
      %s73 = sadd.s32 %s72, 1
      %p76 = scmp.eq.s32.totalorder %s17, 1
      %p77 = scmp.ne.s32.totalorder %s72, %s74
      %p78 = scmp.eq.s32.totalorder %s17, 0
      %p79 = por %p77, %p78
      %p80 = scmp.ne.s32.totalorder %s72, %s74
      %p81 = scmp.eq.s32.totalorder %s22, 1
      %p82 = por %p80, %p81
      %p83 = scmp.ne.s32.totalorder %s74, %s75
      %p84 = scmp.eq.s32.totalorder %s22, 0
      %p85 = por %p83, %p84
      %p86 = scmp.ne.s32.totalorder %s74, %s75
      %p87 = scmp.eq.s32.totalorder %s23, 1
      %p88 = por %p86, %p87
      %p90 = scmp.ne.s32.totalorder %s75, %s89
      %p91 = scmp.eq.s32.totalorder %s23, 0
      %p92 = por %p90, %p91
      %s94 = sadd.s32 %s93, 1
      %p97 = scmp.eq.s32.totalorder %s17, 1
      %p98 = scmp.ne.s32.totalorder %s93, %s95
      %p99 = scmp.eq.s32.totalorder %s17, 0
      %p100 = por %p98, %p99
      %p101 = scmp.ne.s32.totalorder %s93, %s95
      %p102 = scmp.eq.s32.totalorder %s22, 1
      %p103 = por %p101, %p102
      %p104 = scmp.ne.s32.totalorder %s95, %s96
      %p105 = scmp.eq.s32.totalorder %s22, 0
      %p106 = por %p104, %p105
      %p107 = scmp.ne.s32.totalorder %s95, %s96
      %p108 = scmp.eq.s32.totalorder %s23, 1
      %p109 = por %p107, %p108
      %p111 = scmp.ne.s32.totalorder %s96, %s110
      %p112 = scmp.eq.s32.totalorder %s23, 0
      %p113 = por %p111, %p112
      %s115 = sadd.s32 %s114, 1
      %p118 = scmp.eq.s32.totalorder %s17, 1
      %p119 = scmp.ne.s32.totalorder %s114, %s116
      %p120 = scmp.eq.s32.totalorder %s17, 0
      %p121 = por %p119, %p120
      %p122 = scmp.ne.s32.totalorder %s114, %s116
      %p123 = scmp.eq.s32.totalorder %s22, 1
      %p124 = por %p122, %p123
      %p125 = scmp.ne.s32.totalorder %s116, %s117
      %p126 = scmp.eq.s32.totalorder %s22, 0
      %p127 = por %p125, %p126
      %p128 = scmp.ne.s32.totalorder %s116, %s117
      %p129 = scmp.eq.s32.totalorder %s23, 1
      %p130 = por %p128, %p129
      %p132 = scmp.ne.s32.totalorder %s117, %s131
      %p133 = scmp.eq.s32.totalorder %s23, 0
      %p134 = por %p132, %p133
      %s136 = sadd.s32 %s135, 1
      %p139 = scmp.eq.s32.totalorder %s17, 1
      %p140 = scmp.ne.s32.totalorder %s135, %s137
      %p141 = scmp.eq.s32.totalorder %s17, 0
      %p142 = por %p140, %p141
      %p143 = scmp.ne.s32.totalorder %s135, %s137
      %p144 = scmp.eq.s32.totalorder %s22, 1
      %p145 = por %p143, %p144
      %p146 = scmp.ne.s32.totalorder %s137, %s138
      %p147 = scmp.eq.s32.totalorder %s22, 0
      %p148 = por %p146, %p147
      %p149 = scmp.ne.s32.totalorder %s137, %s138
      %p150 = scmp.eq.s32.totalorder %s23, 1
      %p151 = por %p149, %p150
      %p153 = scmp.ne.s32.totalorder %s138, %s152
      %p154 = scmp.eq.s32.totalorder %s23, 0
      %p155 = por %p153, %p154
      %s157 = sadd.s32 %s156, 1
      %p160 = scmp.eq.s32.totalorder %s17, 1
      %p161 = scmp.ne.s32.totalorder %s156, %s158
      %p162 = scmp.eq.s32.totalorder %s17, 0
      %p163 = por %p161, %p162
      %p164 = scmp.ne.s32.totalorder %s156, %s158
      %p165 = scmp.eq.s32.totalorder %s22, 1
      %p166 = por %p164, %p165
      %p167 = scmp.ne.s32.totalorder %s158, %s159
      %p168 = scmp.eq.s32.totalorder %s22, 0
      %p169 = por %p167, %p168
      %p170 = scmp.ne.s32.totalorder %s158, %s159
      %p171 = scmp.eq.s32.totalorder %s23, 1
      %p172 = por %p170, %p171
      %p174 = scmp.ne.s32.totalorder %s159, %s173
      %p175 = scmp.eq.s32.totalorder %s23, 0
      %p176 = por %p174, %p175
      %s178 = sadd.s32 %s177, 1
      %p181 = scmp.eq.s32.totalorder %s17, 1
      %p182 = scmp.ne.s32.totalorder %s177, %s179
      %p183 = scmp.eq.s32.totalorder %s17, 0
      %p184 = por %p182, %p183
      %p185 = scmp.ne.s32.totalorder %s177, %s179
      %p186 = scmp.eq.s32.totalorder %s22, 1
      %p187 = por %p185, %p186
      %p188 = scmp.ne.s32.totalorder %s179, %s180
      %p189 = scmp.eq.s32.totalorder %s22, 0
      %p190 = por %p188, %p189
      %p191 = scmp.ne.s32.totalorder %s179, %s180
      %p192 = scmp.eq.s32.totalorder %s23, 1
      %p193 = por %p191, %p192
      %p195 = scmp.ne.s32.totalorder %s180, %s194
      %p196 = scmp.eq.s32.totalorder %s23, 0
      %p197 = por %p195, %p196
      %s198 = ssub.s32 %s17, %s24
      %p199 = scmp.eq.s32.totalorder %s198, 0
      %s201 = sadd.s32 %s200, 1
      %s202 = scalar_select %p199, %s200, %s201
      %p205 = pneg %p199
      %p206 = scmp.eq.s32.totalorder %s17, 1
      %p207 = por %p205, %p206
      %p208 = scmp.ne.s32.totalorder %s200, %s203
      %p209 = scmp.eq.s32.totalorder %s17, 0
      %p210 = por %p208, %p209
      %p211 = scmp.ne.s32.totalorder %s200, %s203
      %p212 = scmp.eq.s32.totalorder %s22, 1
      %p213 = por %p211, %p212
      %p214 = scmp.ne.s32.totalorder %s203, %s204
      %p215 = scmp.eq.s32.totalorder %s22, 0
      %p216 = por %p214, %p215
      %p217 = scmp.ne.s32.totalorder %s203, %s204
      %p218 = scmp.eq.s32.totalorder %s23, 1
      %p219 = por %p217, %p218
      %p221 = scmp.ne.s32.totalorder %s204, %s220
      %p222 = scmp.eq.s32.totalorder %s23, 0
      %p223 = por %p221, %p222
      %p224 = scmp.le.s32.totalorder 1, %s17
      %p225 = scmp.lt.s32.totalorder %s17, 3
      %p226 = pnand %p224, %p225
      %p227 = pneg %p226
      // Predicated region
      $region9: #{tpu_custom_call.1} parent=5 // pred_check
        _
      $region10: #{tpu_custom_call.1} parent=5 // pred_check_branch
        %229 = sbr.rel (%p226) target = $region12
      $region11: #{tpu_custom_call.1} parent=5 // pred_region
        %s230 = ssub.s32 %s17, 1
        // Predicated region
        $region13: #{tpu_custom_call.1} parent=11 // pred_check
          %p231 = pneg %p64
        $region14: #{tpu_custom_call.1} parent=11 // pred_check_branch
          %233 = sbr.rel (%p231) target = $region16
        $region15: #{tpu_custom_call.1} parent=11 // pred_region
          _
        $region16: #{tpu_custom_call.1} parent=11 // pred_fallthru
          _
        // Predicated region
        $region17: #{tpu_custom_call.1} parent=11 // pred_check
          %p234 = pneg %p85
        $region18: #{tpu_custom_call.1} parent=11 // pred_check_branch
          %236 = sbr.rel (%p234) target = $region20
        $region19: #{tpu_custom_call.1} parent=11 // pred_region
          _
        $region20: #{tpu_custom_call.1} parent=11 // pred_fallthru
          _
        // Predicated region
        $region21: #{tpu_custom_call.1} parent=11 // pred_check
          %p237 = pneg %p106
        $region22: #{tpu_custom_call.1} parent=11 // pred_check_branch
          %239 = sbr.rel (%p237) target = $region24
        $region23: #{tpu_custom_call.1} parent=11 // pred_region
          _
        $region24: #{tpu_custom_call.1} parent=11 // pred_fallthru
          _
        // Predicated region
        $region25: #{tpu_custom_call.1} parent=11 // pred_check
          %p240 = pneg %p127
        $region26: #{tpu_custom_call.1} parent=11 // pred_check_branch
          %242 = sbr.rel (%p240) target = $region28
        $region27: #{tpu_custom_call.1} parent=11 // pred_region
          _
        $region28: #{tpu_custom_call.1} parent=11 // pred_fallthru
          _
        // Predicated region
        $region29: #{tpu_custom_call.1} parent=11 // pred_check
          %p243 = pneg %p148
        $region30: #{tpu_custom_call.1} parent=11 // pred_check_branch
          %245 = sbr.rel (%p243) target = $region32
        $region31: #{tpu_custom_call.1} parent=11 // pred_region
          _
        $region32: #{tpu_custom_call.1} parent=11 // pred_fallthru
          _
        // Predicated region
        $region33: #{tpu_custom_call.1} parent=11 // pred_check
          %p246 = pneg %p169
        $region34: #{tpu_custom_call.1} parent=11 // pred_check_branch
          %248 = sbr.rel (%p246) target = $region36
        $region35: #{tpu_custom_call.1} parent=11 // pred_region
          _
        $region36: #{tpu_custom_call.1} parent=11 // pred_fallthru
          _
        // Predicated region
        $region37: #{tpu_custom_call.1} parent=11 // pred_check
          %p249 = pneg %p190
        $region38: #{tpu_custom_call.1} parent=11 // pred_check_branch
          %251 = sbr.rel (%p249) target = $region40
        $region39: #{tpu_custom_call.1} parent=11 // pred_region
          _
        $region40: #{tpu_custom_call.1} parent=11 // pred_fallthru
          _
      $region12: #{tpu_custom_call.1} parent=5 // pred_fallthru
        _
      %p252 = scmp.lt.s32.totalorder %s17, 2
      // Predicated region
      $region41: #{tpu_custom_call.1} parent=5 // pred_check
        %p253 = pneg %p252
      $region42: #{tpu_custom_call.1} parent=5 // pred_check_branch
        %255 = sbr.rel (%p253) target = $region44
      $region43: #{tpu_custom_call.1} parent=5 // pred_region
        // Predicated region
        $region45: #{tpu_custom_call.1} parent=43 // pred_check
          %p256 = pneg %p37
        $region46: #{tpu_custom_call.1} parent=43 // pred_check_branch
          %258 = sbr.rel (%p256) target = $region48
        $region47: #{tpu_custom_call.1} parent=43 // pred_region
          %s259 = smul.u32 4, %s17
          %p260 = scmp.lt.s32.totalorder %s259, 7
          %s261 = scalar_select %p260, %s259, 7
          %s262 = smul.addr %s261, 2
          %s263 = smul.addr %s262, 8
          %s264 = scalar_lea.vmem %s0, %s263
          %s265 = smul.u32 4, %s17
        $region48: #{tpu_custom_call.1} parent=43 // pred_fallthru
          _
      $region44: #{tpu_custom_call.1} parent=5 // pred_fallthru
        _
      %p266 = scmp.le.s32.totalorder 1, %s17
      %p267 = scmp.lt.s32.totalorder %s17, 3
      %p268 = pnand %p266, %p267
      %p269 = pneg %p268
      // Predicated region
      $region49: #{tpu_custom_call.1} parent=5 // pred_check
        _
      $region50: #{tpu_custom_call.1} parent=5 // pred_check_branch
        %271 = sbr.rel (%p268) target = $region52
      $region51: #{tpu_custom_call.1} parent=5 // pred_region
        %s272 = ssub.s32 %s17, 1
        %s273 = smul.u32 4, %s22
        %p274 = scmp.lt.s32.totalorder %s273, 7
        %s275 = scalar_select %p274, %s273, 7
        %s276 = smul.addr %s275, 2
        %s277 = smul.addr %s276, 8
        %s278 = scalar_lea.vmem %s0, %s277
        %p279 = pneg %p43
        %p280 = pneg %p40
        %p281 = pneg %p64
        %p282 = pneg %p61
        %p283 = pneg %p85
        %p284 = pneg %p82
        %p285 = pneg %p106
        %p286 = pneg %p103
        %p287 = pneg %p127
        %p288 = pneg %p124
        %p289 = pneg %p148
        %p290 = pneg %p145
        %p291 = pneg %p169
        %p292 = pneg %p166
        %p293 = pneg %p190
        %p294 = pneg %p187
        %p295 = pneg %p216
        %p296 = pneg %p213
        %s297 = sand.u32 %s203, 1
        %s298 = scalar_lea.sflag [#allocation3], %s297
        %s299 = sand.u32 %s203, 1
        %s300 = smul.addr %s299, 64
        %s301 = scalar_lea.vmem [#allocation2], %s300
        %s302 = smul.u32 4, %s22
        %p303 = scmp.lt.s32.totalorder %s302, 7
        %s304 = scalar_select %p303, %s302, 7
        %s305 = smul.addr %s304, 2
        %s306 = smul.addr %s305, 8
        %s307 = scalar_lea.vmem %s0, %s306
        %s308 = smul.u32 4, %s22
        %s309 = smul.u32 4, %s22
        %v310 = vld [vmem:[%s307] sm:$0xff]
        %v311 = vld [vmem:[%s307 + $0x8] sm:$0xff]
        %v312 = vld [vmem:[%s307 + $0x10] sm:$0xff]
        %v313 = vld [vmem:[%s307 + $0x18] sm:$0xff]
        %v314 = vld [vmem:[%s307 + $0x20] sm:$0xff]
        %v315 = vld [vmem:[%s307 + $0x28] sm:$0xff]
        %v316 = vld [vmem:[%s307 + $0x30] sm:$0xff]
        %v317 = vld [vmem:[%s307 + $0x38] sm:$0xff]
        %v318 = vld [vmem:[%s5] sm:$0xff]
        %v319 = vld [vmem:[%s5 + $0x8] sm:$0xff]
        %v320 = vld [vmem:[%s5 + $0x10] sm:$0xff]
        %v321 = vld [vmem:[%s5 + $0x18] sm:$0xff]
        %v322 = vld [vmem:[%s5 + $0x20] sm:$0xff]
        %v323 = vld [vmem:[%s5 + $0x28] sm:$0xff]
        %v324 = vld [vmem:[%s5 + $0x30] sm:$0xff]
        %v325 = vld [vmem:[%s5 + $0x38] sm:$0xff]
        %v326 = vld [vmem:[%s5 + $0x40] sm:$0xff]
        %v327 = vld [vmem:[%s5 + $0x48] sm:$0xff]
        %v328 = vld [vmem:[%s5 + $0x50] sm:$0xff]
        %v329 = vld [vmem:[%s5 + $0x58] sm:$0xff]
        %v330 = vld [vmem:[%s5 + $0x60] sm:$0xff]
        %v331 = vld [vmem:[%s5 + $0x68] sm:$0xff]
        %v332 = vld [vmem:[%s5 + $0x70] sm:$0xff]
        %v333 = vld [vmem:[%s5 + $0x78] sm:$0xff]
        %v334 = vld [vmem:[%s5 + $0x80] sm:$0xff]
        %v335 = vld [vmem:[%s5 + $0x88] sm:$0xff]
        %v336 = vld [vmem:[%s5 + $0x90] sm:$0xff]
        %v337 = vld [vmem:[%s5 + $0x98] sm:$0xff]
        %v338 = vld [vmem:[%s5 + $0xa0] sm:$0xff]
        %v339 = vld [vmem:[%s5 + $0xa8] sm:$0xff]
        %v340 = vld [vmem:[%s5 + $0xb0] sm:$0xff]
        %v341 = vld [vmem:[%s5 + $0xb8] sm:$0xff]
        %v342 = vld [vmem:[%s5 + $0xc0] sm:$0xff]
        %v343 = vld [vmem:[%s5 + $0xc8] sm:$0xff]
        %v344 = vld [vmem:[%s5 + $0xd0] sm:$0xff]
        %v345 = vld [vmem:[%s5 + $0xd8] sm:$0xff]
        %v346 = vld [vmem:[%s5 + $0xe0] sm:$0xff]
        %v347 = vld [vmem:[%s5 + $0xe8] sm:$0xff]
        %v348 = vld [vmem:[%s5 + $0xf0] sm:$0xff]
        %v349 = vld [vmem:[%s5 + $0xf8] sm:$0xff]
        %350 = vmatprep.subr.mxu0 0.0
        %351 = vmatpush1.msra.mxu0 %v318
        %352 = vmatprep.subr.mxu0 0.0
        %353 = vmatpush1.msra.mxu0 %v319
        %354 = vmatprep.subr.mxu0 0.0
        %355 = vmatpush1.msra.mxu0 %v320
        %356 = vmatprep.subr.mxu0 0.0
        %357 = vmatpush1.msra.mxu0 %v321
        %358 = vmatprep.subr.mxu0 0.0
        %359 = vmatpush1.msra.mxu0 %v322
        %360 = vmatprep.subr.mxu0 0.0
        %361 = vmatpush1.msra.mxu0 %v323
        %362 = vmatprep.subr.mxu0 0.0
        %363 = vmatpush1.msra.mxu0 %v324
        %364 = vmatprep.subr.mxu0 0.0
        %365 = vmatpush1.msra.mxu0 %v325
        %366 = vmatprep.subr.mxu0 0.0
        %367 = vmatpush1.msra.mxu0 %v326
        %368 = vmatprep.subr.mxu0 0.0
        %369 = vmatpush1.msra.mxu0 %v327
        %370 = vmatprep.subr.mxu0 0.0
        %371 = vmatpush1.msra.mxu0 %v328
        %372 = vmatprep.subr.mxu0 0.0
        %373 = vmatpush1.msra.mxu0 %v329
        %374 = vmatprep.subr.mxu0 0.0
        %375 = vmatpush1.msra.mxu0 %v330
        %376 = vmatprep.subr.mxu0 0.0
        %377 = vmatpush1.msra.mxu0 %v331
        %378 = vmatprep.subr.mxu0 0.0
        %379 = vmatpush1.msra.mxu0 %v332
        %380 = vmatprep.subr.mxu0 0.0
        %381 = vmatpush1.msra.mxu0 %v333
        %382 = vmatprep.subr.mxu0 0.0
        %383 = vmatpush1.msra.mxu0 %v334
        %384 = vmatprep.subr.mxu0 0.0
        %385 = vmatpush1.msra.mxu0 %v335
        %386 = vmatprep.subr.mxu0 0.0
        %387 = vmatpush1.msra.mxu0 %v336
        %388 = vmatprep.subr.mxu0 0.0
        %389 = vmatpush1.msra.mxu0 %v337
        %390 = vmatprep.subr.mxu0 0.0
        %391 = vmatpush1.msra.mxu0 %v338
        %392 = vmatprep.subr.mxu0 0.0
        %393 = vmatpush1.msra.mxu0 %v339
        %394 = vmatprep.subr.mxu0 0.0
        %395 = vmatpush1.msra.mxu0 %v340
        %396 = vmatprep.subr.mxu0 0.0
        %397 = vmatpush1.msra.mxu0 %v341
        %398 = vmatprep.subr.mxu0 0.0
        %399 = vmatpush1.msra.mxu0 %v342
        %400 = vmatprep.subr.mxu0 0.0
        %401 = vmatpush1.msra.mxu0 %v343
        %402 = vmatprep.subr.mxu0 0.0
        %403 = vmatpush1.msra.mxu0 %v344
        %404 = vmatprep.subr.mxu0 0.0
        %405 = vmatpush1.msra.mxu0 %v345
        %406 = vmatprep.subr.mxu0 0.0
        %407 = vmatpush1.msra.mxu0 %v346
        %408 = vmatprep.subr.mxu0 0.0
        %409 = vmatpush1.msra.mxu0 %v347
        %410 = vmatprep.subr.mxu0 0.0
        %411 = vmatpush1.msra.mxu0 %v348
        %412 = vmatprep.subr.mxu0 0.0
        %413 = vmatpush1.msra.mxu0 %v349
        %414 = vmatprep.mubr.f32.mxu0 %v311
        %415 = vmatmul.mubr.f32.gmra.mrb[0].mxu0 %v310
        %v416 = vpop.f32.mrb[0].mxu0
        %v417 = vadd.f32 0.0, %v416
        %v418 = vpop.f32.mrb[0].mxu0
        %419 = vmatprep.mubr.f32.mxu0 %v313
        %420 = vmatmul.mubr.f32.gmra.mrb[0].mxu0 %v312
        %v421 = vpop.f32.mrb[0].mxu0
        %v422 = vadd.f32 0.0, %v421
        %v423 = vpop.f32.mrb[0].mxu0
        %424 = vmatprep.mubr.f32.mxu0 %v315
        %425 = vmatmul.mubr.f32.gmra.mrb[0].mxu0 %v314
        %v426 = vpop.f32.mrb[0].mxu0
        %v427 = vadd.f32 0.0, %v426
        %v428 = vpop.f32.mrb[0].mxu0
        %429 = vmatprep.mubr.f32.mxu0 %v317
        %430 = vmatmul.mubr.f32.gmra.mrb[0].mxu0 %v316
        %v431 = vpop.f32.mrb[0].mxu0
        %v432 = vadd.f32 0.0, %v431
        %v433 = vpop.f32.mrb[0].mxu0
        %434 = vdwg.mxu0
        %v435 = vld [vmem:[%s1] sm:$0x3]
        %v436 = vld [vmem:[%s2] sm:$0x3]
        %438 = vset.pattern.permute.xlu0 0
        %439 = vperm.xlu0 %438, %v436
        %v440 = vpop.permute.xlu0 %439
        %vm442 = vcmask 261120
        %v444 = vsel %vm442, %v435, 0
        %446 = vmatprep.subr.mxu0 0.0
        %447 = vmatpush1.msra.mxu0 %v417
        %448 = vmatprep.subr.mxu0 0.0
        %449 = vmatpush1.msra.mxu0 %v422
        %450 = vmatprep.subr.mxu0 0.0
        %451 = vmatpush1.msra.mxu0 %v427
        %452 = vmatprep.subr.mxu0 0.0
        %453 = vmatpush1.msra.mxu0 %v432
        %454 = vmatprep.subr.mxu0 0.0
        %455 = vmatpush1.msra.mxu0 0.0
        %456 = vmatprep.subr.mxu0 0.0
        %457 = vmatpush1.msra.mxu0 0.0
        %458 = vmatprep.subr.mxu0 0.0
        %459 = vmatpush1.msra.mxu0 0.0
        %460 = vmatprep.subr.mxu0 0.0
        %461 = vmatpush1.msra.mxu0 0.0
        %462 = vmatprep.subr.mxu0 0.0
        %463 = vmatpush1.msra.mxu0 0.0
        %464 = vmatprep.subr.mxu0 0.0
        %465 = vmatpush1.msra.mxu0 0.0
        %466 = vmatprep.subr.mxu0 0.0
        %467 = vmatpush1.msra.mxu0 0.0
        %468 = vmatprep.subr.mxu0 0.0
        %469 = vmatpush1.msra.mxu0 0.0
        %470 = vmatprep.subr.mxu0 0.0
        %471 = vmatpush1.msra.mxu0 0.0
        %472 = vmatprep.subr.mxu0 0.0
        %473 = vmatpush1.msra.mxu0 0.0
        %474 = vmatprep.subr.mxu0 0.0
        %475 = vmatpush1.msra.mxu0 0.0
        %476 = vmatprep.subr.mxu0 0.0
        %477 = vmatpush1.msra.mxu0 0.0
        %478 = vmatprep.subr.mxu0 0.0
        %479 = vmatpush1.msra.mxu0 0.0
        %480 = vmatprep.subr.mxu0 0.0
        %481 = vmatpush1.msra.mxu0 0.0
        %482 = vmatprep.subr.mxu0 0.0
        %483 = vmatpush1.msra.mxu0 0.0
        %484 = vmatprep.subr.mxu0 0.0
        %485 = vmatpush1.msra.mxu0 0.0
        %486 = vmatprep.subr.mxu0 0.0
        %487 = vmatpush1.msra.mxu0 0.0
        %488 = vmatprep.subr.mxu0 0.0
        %489 = vmatpush1.msra.mxu0 0.0
        %490 = vmatprep.subr.mxu0 0.0
        %491 = vmatpush1.msra.mxu0 0.0
        %492 = vmatprep.subr.mxu0 0.0
        %493 = vmatpush1.msra.mxu0 0.0
        %494 = vmatprep.subr.mxu0 0.0
        %495 = vmatpush1.msra.mxu0 0.0
        %496 = vmatprep.subr.mxu0 0.0
        %497 = vmatpush1.msra.mxu0 0.0
        %498 = vmatprep.subr.mxu0 0.0
        %499 = vmatpush1.msra.mxu0 0.0
        %500 = vmatprep.subr.mxu0 0.0
        %501 = vmatpush1.msra.mxu0 0.0
        %502 = vmatprep.subr.mxu0 0.0
        %503 = vmatpush1.msra.mxu0 0.0
        %504 = vmatprep.subr.mxu0 0.0
        %505 = vmatpush1.msra.mxu0 0.0
        %506 = vmatprep.subr.mxu0 0.0
        %507 = vmatpush1.msra.mxu0 0.0
        %508 = vmatprep.subr.mxu0 0.0
        %509 = vmatpush1.msra.mxu0 0.0
        %510 = vmatprep.mubr.f32.mxu0 0.0
        %511 = vmatmul.mubr.f32.gmra.mrb[0].mxu0 %v444
        %v512 = vpop.f32.mrb[0].mxu0
        %v513 = vadd.f32 %v440, %v512
        %v514 = vpop.f32.mrb[0].mxu0
        %515 = vdwg.mxu0
        %v516 = vmax.f32 %v513, 0.0
        %v517 = vld [vmem:[%s3] sm:$0xff]
        %v518 = vld [vmem:[%s3 + $0x8] sm:$0xff]
        %v519 = vld [vmem:[%s3 + $0x10] sm:$0xff]
        %v520 = vld [vmem:[%s3 + $0x18] sm:$0xff]
        %vm521 = vcmask 15360
        %v523 = vsel %vm521, %v517, 0
        %v526 = vsel %vm521, %v518, 0
        %v529 = vsel %vm521, %v519, 0
        %v532 = vsel %vm521, %v520, 0
        %vm534 = vcmask 1041408
        %v536 = vsel %vm534, %v516, 0
        %538 = vmatprep.subr.mxu0 0.0
        %539 = vmatpush1.msra.mxu0 %v536
        %540 = vmatprep.subr.mxu0 0.0
        %541 = vmatpush1.msra.mxu0 0.0
        %542 = vmatprep.subr.mxu0 0.0
        %543 = vmatpush1.msra.mxu0 0.0
        %544 = vmatprep.subr.mxu0 0.0
        %545 = vmatpush1.msra.mxu0 0.0
        %546 = vmatprep.subr.mxu0 0.0
        %547 = vmatpush1.msra.mxu0 0.0
        %548 = vmatprep.subr.mxu0 0.0
        %549 = vmatpush1.msra.mxu0 0.0
        %550 = vmatprep.subr.mxu0 0.0
        %551 = vmatpush1.msra.mxu0 0.0
        %552 = vmatprep.subr.mxu0 0.0
        %553 = vmatpush1.msra.mxu0 0.0
        %554 = vmatprep.subr.mxu0 0.0
        %555 = vmatpush1.msra.mxu0 0.0
        %556 = vmatprep.subr.mxu0 0.0
        %557 = vmatpush1.msra.mxu0 0.0
        %558 = vmatprep.subr.mxu0 0.0
        %559 = vmatpush1.msra.mxu0 0.0
        %560 = vmatprep.subr.mxu0 0.0
        %561 = vmatpush1.msra.mxu0 0.0
        %562 = vmatprep.subr.mxu0 0.0
        %563 = vmatpush1.msra.mxu0 0.0
        %564 = vmatprep.subr.mxu0 0.0
        %565 = vmatpush1.msra.mxu0 0.0
        %566 = vmatprep.subr.mxu0 0.0
        %567 = vmatpush1.msra.mxu0 0.0
        %568 = vmatprep.subr.mxu0 0.0
        %569 = vmatpush1.msra.mxu0 0.0
        %570 = vmatprep.subr.mxu0 0.0
        %571 = vmatpush1.msra.mxu0 0.0
        %572 = vmatprep.subr.mxu0 0.0
        %573 = vmatpush1.msra.mxu0 0.0
        %574 = vmatprep.subr.mxu0 0.0
        %575 = vmatpush1.msra.mxu0 0.0
        %576 = vmatprep.subr.mxu0 0.0
        %577 = vmatpush1.msra.mxu0 0.0
        %578 = vmatprep.subr.mxu0 0.0
        %579 = vmatpush1.msra.mxu0 0.0
        %580 = vmatprep.subr.mxu0 0.0
        %581 = vmatpush1.msra.mxu0 0.0
        %582 = vmatprep.subr.mxu0 0.0
        %583 = vmatpush1.msra.mxu0 0.0
        %584 = vmatprep.subr.mxu0 0.0
        %585 = vmatpush1.msra.mxu0 0.0
        %586 = vmatprep.subr.mxu0 0.0
        %587 = vmatpush1.msra.mxu0 0.0
        %588 = vmatprep.subr.mxu0 0.0
        %589 = vmatpush1.msra.mxu0 0.0
        %590 = vmatprep.subr.mxu0 0.0
        %591 = vmatpush1.msra.mxu0 0.0
        %592 = vmatprep.subr.mxu0 0.0
        %593 = vmatpush1.msra.mxu0 0.0
        %594 = vmatprep.subr.mxu0 0.0
        %595 = vmatpush1.msra.mxu0 0.0
        %596 = vmatprep.subr.mxu0 0.0
        %597 = vmatpush1.msra.mxu0 0.0
        %598 = vmatprep.subr.mxu0 0.0
        %599 = vmatpush1.msra.mxu0 0.0
        %600 = vmatprep.subr.mxu0 0.0
        %601 = vmatpush1.msra.mxu0 0.0
        %602 = vmatprep.mubr.f32.mxu0 0.0
        %603 = vmatmul.mubr.f32.gmra.mrb[0].mxu0 %v523
        %v604 = vpop.f32.mrb[0].mxu0
        %v605 = vadd.f32 0.0, %v604
        %v606 = vpop.f32.mrb[0].mxu0
        %607 = vmatprep.mubr.f32.mxu0 0.0
        %608 = vmatmul.mubr.f32.gmra.mrb[0].mxu0 %v526
        %v609 = vpop.f32.mrb[0].mxu0
        %v610 = vadd.f32 0.0, %v609
        %v611 = vpop.f32.mrb[0].mxu0
        %612 = vmatprep.mubr.f32.mxu0 0.0
        %613 = vmatmul.mubr.f32.gmra.mrb[0].mxu0 %v529
        %v614 = vpop.f32.mrb[0].mxu0
        %v615 = vadd.f32 0.0, %v614
        %v616 = vpop.f32.mrb[0].mxu0
        %617 = vmatprep.mubr.f32.mxu0 0.0
        %618 = vmatmul.mubr.f32.gmra.mrb[0].mxu0 %v532
        %v619 = vpop.f32.mrb[0].mxu0
        %v620 = vadd.f32 0.0, %v619
        %v621 = vpop.f32.mrb[0].mxu0
        %622 = vdwg.mxu0
        %v623 = vxor.u32 %v605, 2147483648
        %v624 = vxor.u32 %v610, 2147483648
        %v625 = vxor.u32 %v615, 2147483648
        %v626 = vxor.u32 %v620, 2147483648
        %v627 = vmul.f32 %v623, 1.442695
        %v628 = vpow.pop %v627
        %v629 = vmul.f32 %v624, 1.442695
        %v630 = vpow.pop %v629
        %v631 = vmul.f32 %v625, 1.442695
        %v632 = vpow.pop %v631
        %v633 = vmul.f32 %v626, 1.442695
        %v634 = vpow.pop %v633
        %v635 = vadd.f32 %v628, 1.0
        %v636 = vadd.f32 %v630, 1.0
        %v637 = vadd.f32 %v632, 1.0
        %v638 = vadd.f32 %v634, 1.0
        %v639 = vrcp.pop %v635
        %v640 = vmul.f32 1.0, %v639
        %v641 = vrcp.pop %v636
        %v642 = vmul.f32 1.0, %v641
        %v643 = vrcp.pop %v637
        %v644 = vmul.f32 1.0, %v643
        %v645 = vrcp.pop %v638
        %v646 = vmul.f32 1.0, %v645
        %v647 = vld [vmem:[%s4] sm:$0xff]
        %v648 = vld [vmem:[%s4 + $0x8] sm:$0xff]
        %v649 = vld [vmem:[%s4 + $0x10] sm:$0xff]
        %v650 = vld [vmem:[%s4 + $0x18] sm:$0xff]
        %651 = vrot.lane.b32.xlu0 %v516, 112
        %v652 = vpop.permute.xlu0 %651
        %v654 = vsel %vm521, %v647, 0
        %v657 = vsel %vm521, %v648, 0
        %v660 = vsel %vm521, %v649, 0
        %v663 = vsel %vm521, %v650, 0
        %v665 = vsel %vm534, %v652, 0
        %667 = vmatprep.subr.mxu0 0.0
        %668 = vmatpush1.msra.mxu0 %v665
        %669 = vmatprep.subr.mxu0 0.0
        %670 = vmatpush1.msra.mxu0 0.0
        %671 = vmatprep.subr.mxu0 0.0
        %672 = vmatpush1.msra.mxu0 0.0
        %673 = vmatprep.subr.mxu0 0.0
        %674 = vmatpush1.msra.mxu0 0.0
        %675 = vmatprep.subr.mxu0 0.0
        %676 = vmatpush1.msra.mxu0 0.0
        %677 = vmatprep.subr.mxu0 0.0
        %678 = vmatpush1.msra.mxu0 0.0
        %679 = vmatprep.subr.mxu0 0.0
        %680 = vmatpush1.msra.mxu0 0.0
        %681 = vmatprep.subr.mxu0 0.0
        %682 = vmatpush1.msra.mxu0 0.0
        %683 = vmatprep.subr.mxu0 0.0
        %684 = vmatpush1.msra.mxu0 0.0
        %685 = vmatprep.subr.mxu0 0.0
        %686 = vmatpush1.msra.mxu0 0.0
        %687 = vmatprep.subr.mxu0 0.0
        %688 = vmatpush1.msra.mxu0 0.0
        %689 = vmatprep.subr.mxu0 0.0
        %690 = vmatpush1.msra.mxu0 0.0
        %691 = vmatprep.subr.mxu0 0.0
        %692 = vmatpush1.msra.mxu0 0.0
        %693 = vmatprep.subr.mxu0 0.0
        %694 = vmatpush1.msra.mxu0 0.0
        %695 = vmatprep.subr.mxu0 0.0
        %696 = vmatpush1.msra.mxu0 0.0
        %697 = vmatprep.subr.mxu0 0.0
        %698 = vmatpush1.msra.mxu0 0.0
        %699 = vmatprep.subr.mxu0 0.0
        %700 = vmatpush1.msra.mxu0 0.0
        %701 = vmatprep.subr.mxu0 0.0
        %702 = vmatpush1.msra.mxu0 0.0
        %703 = vmatprep.subr.mxu0 0.0
        %704 = vmatpush1.msra.mxu0 0.0
        %705 = vmatprep.subr.mxu0 0.0
        %706 = vmatpush1.msra.mxu0 0.0
        %707 = vmatprep.subr.mxu0 0.0
        %708 = vmatpush1.msra.mxu0 0.0
        %709 = vmatprep.subr.mxu0 0.0
        %710 = vmatpush1.msra.mxu0 0.0
        %711 = vmatprep.subr.mxu0 0.0
        %712 = vmatpush1.msra.mxu0 0.0
        %713 = vmatprep.subr.mxu0 0.0
        %714 = vmatpush1.msra.mxu0 0.0
        %715 = vmatprep.subr.mxu0 0.0
        %716 = vmatpush1.msra.mxu0 0.0
        %717 = vmatprep.subr.mxu0 0.0
        %718 = vmatpush1.msra.mxu0 0.0
        %719 = vmatprep.subr.mxu0 0.0
        %720 = vmatpush1.msra.mxu0 0.0
        %721 = vmatprep.subr.mxu0 0.0
        %722 = vmatpush1.msra.mxu0 0.0
        %723 = vmatprep.subr.mxu0 0.0
        %724 = vmatpush1.msra.mxu0 0.0
        %725 = vmatprep.subr.mxu0 0.0
        %726 = vmatpush1.msra.mxu0 0.0
        %727 = vmatprep.subr.mxu0 0.0
        %728 = vmatpush1.msra.mxu0 0.0
        %729 = vmatprep.subr.mxu0 0.0
        %730 = vmatpush1.msra.mxu0 0.0
        %731 = vmatprep.mubr.f32.mxu0 0.0
        %732 = vmatmul.mubr.f32.gmra.mrb[0].mxu0 %v654
        %v733 = vpop.f32.mrb[0].mxu0
        %v734 = vadd.f32 0.0, %v733
        %v735 = vpop.f32.mrb[0].mxu0
        %736 = vmatprep.mubr.f32.mxu0 0.0
        %737 = vmatmul.mubr.f32.gmra.mrb[0].mxu0 %v657
        %v738 = vpop.f32.mrb[0].mxu0
        %v739 = vadd.f32 0.0, %v738
        %v740 = vpop.f32.mrb[0].mxu0
        %741 = vmatprep.mubr.f32.mxu0 0.0
        %742 = vmatmul.mubr.f32.gmra.mrb[0].mxu0 %v660
        %v743 = vpop.f32.mrb[0].mxu0
        %v744 = vadd.f32 0.0, %v743
        %v745 = vpop.f32.mrb[0].mxu0
        %746 = vmatprep.mubr.f32.mxu0 0.0
        %747 = vmatmul.mubr.f32.gmra.mrb[0].mxu0 %v663
        %v748 = vpop.f32.mrb[0].mxu0
        %v749 = vadd.f32 0.0, %v748
        %v750 = vpop.f32.mrb[0].mxu0
        %751 = vdwg.mxu0
        %v752 = vxor.u32 %v734, 2147483648
        %v753 = vxor.u32 %v739, 2147483648
        %v754 = vxor.u32 %v744, 2147483648
        %v755 = vxor.u32 %v749, 2147483648
        %v756 = vmul.f32 %v752, 1.442695
        %v757 = vpow.pop %v756
        %v758 = vmul.f32 %v753, 1.442695
        %v759 = vpow.pop %v758
        %v760 = vmul.f32 %v754, 1.442695
        %v761 = vpow.pop %v760
        %v762 = vmul.f32 %v755, 1.442695
        %v763 = vpow.pop %v762
        %v764 = vadd.f32 %v757, 1.0
        %v765 = vadd.f32 %v759, 1.0
        %v766 = vadd.f32 %v761, 1.0
        %v767 = vadd.f32 %v763, 1.0
        %v768 = vrcp.pop %v764
        %v769 = vmul.f32 1.0, %v768
        %v770 = vrcp.pop %v765
        %v771 = vmul.f32 1.0, %v770
        %v772 = vrcp.pop %v766
        %v773 = vmul.f32 1.0, %v772
        %v774 = vrcp.pop %v767
        %v775 = vmul.f32 1.0, %v774
        %v776 = vld [vmem:[%s6] sm:$0xff]
        %v777 = vld [vmem:[%s6 + $0x8] sm:$0xff]
        %v778 = vld [vmem:[%s6 + $0x10] sm:$0xff]
        %v779 = vld [vmem:[%s6 + $0x18] sm:$0xff]
        %vm780 = vcmask 130048
        %v782 = vsel %vm780, %v640, 0
        %v785 = vsel %vm780, %v642, 0
        %v788 = vsel %vm780, %v644, 0
        %v791 = vsel %vm780, %v646, 0
        %793 = vmatprep.subr.mxu0 %v777
        %794 = vmatpush1.msra.mxu0 %v776
        %795 = vmatprep.subr.mxu0 %v779
        %796 = vmatpush1.msra.mxu0 %v778
        %797 = vmatprep.subr.mxu0 0.0
        %798 = vmatpush1.msra.mxu0 0.0
        %799 = vmatprep.subr.mxu0 0.0
        %800 = vmatpush1.msra.mxu0 0.0
        %801 = vmatprep.subr.mxu0 0.0
        %802 = vmatpush1.msra.mxu0 0.0
        %803 = vmatprep.subr.mxu0 0.0
        %804 = vmatpush1.msra.mxu0 0.0
        %805 = vmatprep.subr.mxu0 0.0
        %806 = vmatpush1.msra.mxu0 0.0
        %807 = vmatprep.subr.mxu0 0.0
        %808 = vmatpush1.msra.mxu0 0.0
        %809 = vmatprep.subr.mxu0 0.0
        %810 = vmatpush1.msra.mxu0 0.0
        %811 = vmatprep.subr.mxu0 0.0
        %812 = vmatpush1.msra.mxu0 0.0
        %813 = vmatprep.subr.mxu0 0.0
        %814 = vmatpush1.msra.mxu0 0.0
        %815 = vmatprep.subr.mxu0 0.0
        %816 = vmatpush1.msra.mxu0 0.0
        %817 = vmatprep.subr.mxu0 0.0
        %818 = vmatpush1.msra.mxu0 0.0
        %819 = vmatprep.subr.mxu0 0.0
        %820 = vmatpush1.msra.mxu0 0.0
        %821 = vmatprep.subr.mxu0 0.0
        %822 = vmatpush1.msra.mxu0 0.0
        %823 = vmatprep.subr.mxu0 0.0
        %824 = vmatpush1.msra.mxu0 0.0
        %825 = vmatprep.subr.mxu0 0.0
        %826 = vmatpush1.msra.mxu0 0.0
        %827 = vmatprep.subr.mxu0 0.0
        %828 = vmatpush1.msra.mxu0 0.0
        %829 = vmatprep.subr.mxu0 0.0
        %830 = vmatpush1.msra.mxu0 0.0
        %831 = vmatprep.subr.mxu0 0.0
        %832 = vmatpush1.msra.mxu0 0.0
        %833 = vmatprep.subr.mxu0 0.0
        %834 = vmatpush1.msra.mxu0 0.0
        %835 = vmatprep.subr.mxu0 0.0
        %836 = vmatpush1.msra.mxu0 0.0
        %837 = vmatprep.subr.mxu0 0.0
        %838 = vmatpush1.msra.mxu0 0.0
        %839 = vmatprep.subr.mxu0 0.0
        %840 = vmatpush1.msra.mxu0 0.0
        %841 = vmatprep.subr.mxu0 0.0
        %842 = vmatpush1.msra.mxu0 0.0
        %843 = vmatprep.subr.mxu0 0.0
        %844 = vmatpush1.msra.mxu0 0.0
        %845 = vmatprep.subr.mxu0 0.0
        %846 = vmatpush1.msra.mxu0 0.0
        %847 = vmatprep.subr.mxu0 0.0
        %848 = vmatpush1.msra.mxu0 0.0
        %849 = vmatprep.subr.mxu0 0.0
        %850 = vmatpush1.msra.mxu0 0.0
        %851 = vmatprep.subr.mxu0 0.0
        %852 = vmatpush1.msra.mxu0 0.0
        %853 = vmatprep.subr.mxu0 0.0
        %854 = vmatpush1.msra.mxu0 0.0
        %855 = vmatprep.subr.mxu0 0.0
        %856 = vmatpush1.msra.mxu0 0.0
        %857 = vmatprep.mubr.f32.mxu0 0.0
        %858 = vmatmul.mubr.f32.gmra.mrb[0].mxu0 %v782
        %v859 = vpop.f32.mrb[0].mxu0
        %v860 = vadd.f32 0.0, %v859
        %v861 = vpop.f32.mrb[0].mxu0
        %v862 = vadd.f32 0.0, %v861
        %863 = vmatprep.mubr.f32.mxu0 0.0
        %864 = vmatmul.mubr.f32.gmra.mrb[0].mxu0 %v785
        %v865 = vpop.f32.mrb[0].mxu0
        %v866 = vadd.f32 0.0, %v865
        %v867 = vpop.f32.mrb[0].mxu0
        %v868 = vadd.f32 0.0, %v867
        %869 = vmatprep.mubr.f32.mxu0 0.0
        %870 = vmatmul.mubr.f32.gmra.mrb[0].mxu0 %v788
        %v871 = vpop.f32.mrb[0].mxu0
        %v872 = vadd.f32 0.0, %v871
        %v873 = vpop.f32.mrb[0].mxu0
        %v874 = vadd.f32 0.0, %v873
        %875 = vmatprep.mubr.f32.mxu0 0.0
        %876 = vmatmul.mubr.f32.gmra.mrb[0].mxu0 %v791
        %v877 = vpop.f32.mrb[0].mxu0
        %v878 = vadd.f32 0.0, %v877
        %v879 = vpop.f32.mrb[0].mxu0
        %v880 = vadd.f32 0.0, %v879
        %881 = vdwg.mxu0
        %v882 = vld [vmem:[%s7] sm:$0xff]
        %v883 = vld [vmem:[%s7 + $0x8] sm:$0xff]
        %v884 = vld [vmem:[%s7 + $0x10] sm:$0xff]
        %v885 = vld [vmem:[%s7 + $0x18] sm:$0xff]
        %v887 = vsel %vm780, %v769, 0
        %v890 = vsel %vm780, %v771, 0
        %v893 = vsel %vm780, %v773, 0
        %v896 = vsel %vm780, %v775, 0
        %898 = vmatprep.subr.mxu0 %v883
        %899 = vmatpush1.msra.mxu0 %v882
        %900 = vmatprep.subr.mxu0 %v885
        %901 = vmatpush1.msra.mxu0 %v884
        %902 = vmatprep.subr.mxu0 0.0
        %903 = vmatpush1.msra.mxu0 0.0
        %904 = vmatprep.subr.mxu0 0.0
        %905 = vmatpush1.msra.mxu0 0.0
        %906 = vmatprep.subr.mxu0 0.0
        %907 = vmatpush1.msra.mxu0 0.0
        %908 = vmatprep.subr.mxu0 0.0
        %909 = vmatpush1.msra.mxu0 0.0
        %910 = vmatprep.subr.mxu0 0.0
        %911 = vmatpush1.msra.mxu0 0.0
        %912 = vmatprep.subr.mxu0 0.0
        %913 = vmatpush1.msra.mxu0 0.0
        %914 = vmatprep.subr.mxu0 0.0
        %915 = vmatpush1.msra.mxu0 0.0
        %916 = vmatprep.subr.mxu0 0.0
        %917 = vmatpush1.msra.mxu0 0.0
        %918 = vmatprep.subr.mxu0 0.0
        %919 = vmatpush1.msra.mxu0 0.0
        %920 = vmatprep.subr.mxu0 0.0
        %921 = vmatpush1.msra.mxu0 0.0
        %922 = vmatprep.subr.mxu0 0.0
        %923 = vmatpush1.msra.mxu0 0.0
        %924 = vmatprep.subr.mxu0 0.0
        %925 = vmatpush1.msra.mxu0 0.0
        %926 = vmatprep.subr.mxu0 0.0
        %927 = vmatpush1.msra.mxu0 0.0
        %928 = vmatprep.subr.mxu0 0.0
        %929 = vmatpush1.msra.mxu0 0.0
        %930 = vmatprep.subr.mxu0 0.0
        %931 = vmatpush1.msra.mxu0 0.0
        %932 = vmatprep.subr.mxu0 0.0
        %933 = vmatpush1.msra.mxu0 0.0
        %934 = vmatprep.subr.mxu0 0.0
        %935 = vmatpush1.msra.mxu0 0.0
        %936 = vmatprep.subr.mxu0 0.0
        %937 = vmatpush1.msra.mxu0 0.0
        %938 = vmatprep.subr.mxu0 0.0
        %939 = vmatpush1.msra.mxu0 0.0
        %940 = vmatprep.subr.mxu0 0.0
        %941 = vmatpush1.msra.mxu0 0.0
        %942 = vmatprep.subr.mxu0 0.0
        %943 = vmatpush1.msra.mxu0 0.0
        %944 = vmatprep.subr.mxu0 0.0
        %945 = vmatpush1.msra.mxu0 0.0
        %946 = vmatprep.subr.mxu0 0.0
        %947 = vmatpush1.msra.mxu0 0.0
        %948 = vmatprep.subr.mxu0 0.0
        %949 = vmatpush1.msra.mxu0 0.0
        %950 = vmatprep.subr.mxu0 0.0
        %951 = vmatpush1.msra.mxu0 0.0
        %952 = vmatprep.subr.mxu0 0.0
        %953 = vmatpush1.msra.mxu0 0.0
        %954 = vmatprep.subr.mxu0 0.0
        %955 = vmatpush1.msra.mxu0 0.0
        %956 = vmatprep.subr.mxu0 0.0
        %957 = vmatpush1.msra.mxu0 0.0
        %958 = vmatprep.subr.mxu0 0.0
        %959 = vmatpush1.msra.mxu0 0.0
        %960 = vmatprep.subr.mxu0 0.0
        %961 = vmatpush1.msra.mxu0 0.0
        %962 = vmatprep.mubr.f32.mxu0 0.0
        %963 = vmatmul.mubr.f32.gmra.mrb[0].mxu0 %v887
        %v964 = vpop.f32.mrb[0].mxu0
        %v965 = vadd.f32 0.0, %v964
        %v966 = vpop.f32.mrb[0].mxu0
        %v967 = vadd.f32 0.0, %v966
        %968 = vmatprep.mubr.f32.mxu0 0.0
        %969 = vmatmul.mubr.f32.gmra.mrb[0].mxu0 %v890
        %v970 = vpop.f32.mrb[0].mxu0
        %v971 = vadd.f32 0.0, %v970
        %v972 = vpop.f32.mrb[0].mxu0
        %v973 = vadd.f32 0.0, %v972
        %974 = vmatprep.mubr.f32.mxu0 0.0
        %975 = vmatmul.mubr.f32.gmra.mrb[0].mxu0 %v893
        %v976 = vpop.f32.mrb[0].mxu0
        %v977 = vadd.f32 0.0, %v976
        %v978 = vpop.f32.mrb[0].mxu0
        %v979 = vadd.f32 0.0, %v978
        %980 = vmatprep.mubr.f32.mxu0 0.0
        %981 = vmatmul.mubr.f32.gmra.mrb[0].mxu0 %v896
        %v982 = vpop.f32.mrb[0].mxu0
        %v983 = vadd.f32 0.0, %v982
        %v984 = vpop.f32.mrb[0].mxu0
        %v985 = vadd.f32 0.0, %v984
        %986 = vdwg.mxu0
        %v987 = vmul.f32 %v860, %v965
        %v988 = vmul.f32 %v862, %v967
        %v989 = vmul.f32 %v866, %v971
        %v990 = vmul.f32 %v868, %v973
        %v991 = vmul.f32 %v872, %v977
        %v992 = vmul.f32 %v874, %v979
        %v993 = vmul.f32 %v878, %v983
        %v994 = vmul.f32 %v880, %v985
        %v995 = vmul.f32 %v310, %v987
        %v996 = vmul.f32 %v311, %v988
        %v997 = vmul.f32 %v312, %v989
        %v998 = vmul.f32 %v313, %v990
        %v999 = vmul.f32 %v314, %v991
        %v1000 = vmul.f32 %v315, %v992
        %v1001 = vmul.f32 %v316, %v993
        %v1002 = vmul.f32 %v317, %v994
        %1003 = vst [vmem:[%s301] sm:$0xff] %v995
        %1004 = vst [vmem:[%s301 + $0x8] sm:$0xff] %v996
        %1005 = vst [vmem:[%s301 + $0x10] sm:$0xff] %v997
        %1006 = vst [vmem:[%s301 + $0x18] sm:$0xff] %v998
        %1007 = vst [vmem:[%s301 + $0x20] sm:$0xff] %v999
        %1008 = vst [vmem:[%s301 + $0x28] sm:$0xff] %v1000
        %1009 = vst [vmem:[%s301 + $0x30] sm:$0xff] %v1001
        %1010 = vst [vmem:[%s301 + $0x38] sm:$0xff] %v1002
        %s1011 = sand.u32 %s203, 1
        %s1012 = scalar_lea.sflag [#allocation3], %s1011
        %s1013 = sand.u32 %s203, 1
        %s1014 = smul.addr %s1013, 64
        %s1015 = scalar_lea.vmem [#allocation2], %s1014
        // Predicated region
        $region53: #{tpu_custom_call.1} parent=51 // pred_check
          %p1016 = pneg %p213
        $region54: #{tpu_custom_call.1} parent=51 // pred_check_branch
          %1018 = sbr.rel (%p1016) target = $region56
        $region55: #{tpu_custom_call.1} parent=51 // pred_region
          %s1019 = smul.u32 4, %s22
          %s1021 = ssub.s32 1024, 1024
          %1022 = vsyncadd %s1012, %s1021
          %s1023 = smul.addr %s1019, 2
          %s1024 = smul.addr %s1023, 128
          %s1025 = scalar_lea.hbm %s8, %s1024
          %s1026 = sshll.u32 %s1015, 4
          %s1027 = int_to_ptr.vmem [resolvable:$true] %s1026
          %1032 = dma.vmem_to_hbm [thread:$0]  %s1027, 1024, %s1025, %s1012, 256, 256, 16
        $region56: #{tpu_custom_call.1} parent=51 // pred_fallthru
          _
      $region52: #{tpu_custom_call.1} parent=5 // pred_fallthru
        _
      %p1033 = scmp.le.s32.totalorder 2, %s17
      // Predicated region
      $region57: #{tpu_custom_call.1} parent=5 // pred_check
        %p1034 = pneg %p1033
      $region58: #{tpu_custom_call.1} parent=5 // pred_check_branch
        %1036 = sbr.rel (%p1034) target = $region60
      $region59: #{tpu_custom_call.1} parent=5 // pred_region
        %s1037 = ssub.s32 %s17, 2
        // Predicated region
        $region61: #{tpu_custom_call.1} parent=59 // pred_check
          %p1038 = pneg %p219
        $region62: #{tpu_custom_call.1} parent=59 // pred_check_branch
          %1040 = sbr.rel (%p1038) target = $region64
        $region63: #{tpu_custom_call.1} parent=59 // pred_region
          %s1041 = sand.u32 %s204, 1
          %s1042 = scalar_lea.sflag [#allocation3], %s1041
          %s1043 = sand.u32 %s204, 1
          %s1044 = smul.addr %s1043, 64
          %s1045 = scalar_lea.vmem [#allocation2], %s1044
          %1046 = dma.done %s1042, 1024
        $region64: #{tpu_custom_call.1} parent=59 // pred_fallthru
          _
      $region60: #{tpu_custom_call.1} parent=5 // pred_fallthru
        _
    $region6: #{tpu_custom_call.1} parent=1 // loop_footer
      %s21 = sadd.s32 1, %s17
    $region7: #{tpu_custom_call.1} parent=1 // loop_footer_branch
      %16 = sbr.rel target = $region3
    $region8: #{tpu_custom_call.1} parent=1 // loop_exit
      _
    %1047 = vsyncpa [#allocation3], 1
    %s1048 = scalar_lea.sflag [#allocation3], 1
    %1049 = vsyncpa %s1048, 1

</llo_original>
